<compile_context>
chip_gen: v7x
topology: tpu7x:2x2x1
jax: 0.10.0
libtpu: 0.0.40
codegen_flags: <defaults>
</compile_context>

<pallas_src>
import functools

import jax
import jax.numpy as jnp
from jax import lax
from jax.experimental import pallas as pl
from jax.experimental.pallas import tpu as pltpu

C_IN, C_OUT, KSIZE = 10, 10, 3    # nn.Conv2d(10, 10, 3): stride=1, padding=0, bias=True
POOL = 3                          # nn.MaxPool2d(3): kernel=3, stride=3, padding=0
PRELU_ALPHA = 0.25                # nn.PReLU() default init (passed as runtime scalar)
K_RAW = KSIZE * KSIZE * C_IN      # 90: im2col contraction length
K_PAD = 96                        # sublane-aligned contraction length (zero-padded)


# ----------------------------------------------------------------------------
# Conv2d(10, 10, 3) + bias + activation (single grid step over the batch).
# ----------------------------------------------------------------------------
def _conv2d_act_kernel(x_ref, w_ref, b_ref, alpha_ref, o_ref, *, in_w, use_relu):
    # x_ref: (N, Cin, H*W + KSIZE-1)   w_ref: (Cout, K_PAD)   b_ref: (Cout, 1)
    # alpha_ref: (1,) in SMEM          o_ref: (N, Cout, Hout*W)  [lane-dense]
    n, cout, l = o_ref.shape
    cin = x_ref.shape[1]
    k_pad = w_ref.shape[1]
    wmat = w_ref[...]                                    # load once, reused for all items
    bias = jnp.broadcast_to(b_ref[...], (cout, l))       # broadcast hoisted out of loop
    pad_rows = k_pad - KSIZE * KSIZE * cin
    zpad = jnp.zeros((pad_rows, l), x_ref.dtype) if pad_rows > 0 else None

    for i in range(n):                                   # static unroll: N is tiny
        xi = x_ref[i]                                    # (Cin, H*W + 2)
        # Lane-contiguous im2col: each (kh, kw) patch is a lane-offset slice of the
        # row-major flattened spatial axis; row order (kh, kw, cin) matches w_ref.
        patches = [xi[:, kh * in_w + kw: kh * in_w + kw + l]
                   for kh in range(KSIZE) for kw in range(KSIZE)]   # 9 x (Cin, L)
        if zpad is not None:
            patches.append(zpad)                         # rows 90..95 hit zero weights
        p = jnp.concatenate(patches, axis=0)             # (K_PAD, L): sublane concat only
        acc = jnp.dot(wmat, p, preferred_element_type=jnp.float32)  # one MXU push / item
        acc = acc + bias
        if use_relu:
            acc = jnp.maximum(acc, 0.0)                  # exact ReLU (-0.0 / inf safe)
        else:
            acc = jnp.where(acc > 0, acc, alpha_ref[0] * acc)       # PReLU, runtime alpha
        o_ref[i] = acc.astype(o_ref.dtype)               # 224-lane dense store


def conv2d_act_pallas(x, w2d, b2d, alpha, use_relu):
    n, cin, h, w = x.shape
    cout = w2d.shape[0]
    hout, wout = h - KSIZE + 1, w - KSIZE + 1
    l = hout * w                                         # per-item matmul width (224)
    hw_pad = h * w + (KSIZE - 1)                         # keeps the (2,2) slice in-bounds
    # Free metadata reshape + tiny HBM pad; wrap-around garbage cols cropped below.
    x_flat = jnp.pad(x.reshape(n, cin, h * w), ((0, 0), (0, 0), (0, KSIZE - 1)))
    alpha_arr = jnp.full((1,), alpha, jnp.float32)
    kernel = functools.partial(_conv2d_act_kernel, in_w=w, use_relu=use_relu)
    y = pl.pallas_call(
        kernel,
        out_shape=jax.ShapeDtypeStruct((n, cout, l), x.dtype),
        grid=(1,),                                       # whole batch in one step
        in_specs=[
            pl.BlockSpec((n, cin, hw_pad), lambda i: (0, 0, 0)),
            pl.BlockSpec((cout, K_PAD), lambda i: (0, 0)),
            pl.BlockSpec((cout, 1), lambda i: (0, 0)),
            pl.BlockSpec(memory_space=pltpu.MemorySpace.SMEM),
        ],
        out_specs=pl.BlockSpec((n, cout, l), lambda i: (0, 0, 0)),
        cost_estimate=pl.CostEstimate(
            flops=2 * n * cout * K_RAW * hout * wout,
            transcendentals=0,
            bytes_accessed=(x_flat.size + w2d.size + b2d.size + n * cout * l) * 4,
        ),
    )(x_flat, w2d, b2d, alpha_arr)
    # Free reshape on contiguous HBM, then crop the KSIZE-1 garbage cols per row.
    return y.reshape(n, cout, hout, w)[..., :wout]


# ----------------------------------------------------------------------------
# MaxPool2d(3) + activation (single grid step over the batch).
# ----------------------------------------------------------------------------
def _maxpool_act_kernel(x_ref, alpha_ref, o_ref, *, hout, wout, use_relu):
    # x_ref: (N, C, H, W)   alpha_ref: (1,) SMEM   o_ref: (N, C, Hout*Wout)
    n, c, _, _ = x_ref.shape
    x = x_ref[...]                                       # one load of the whole batch
    xv = x[:, :, :hout * POOL, :wout * POOL]             # VALID crop, e.g. (N, C, 15, 15)
    # Reduce the H (sublane) window first with VPU maxes -> 3x less data ...
    xh = jnp.max(xv.reshape(n, c, hout, POOL, wout * POOL), axis=3)   # (N, C, 5, 15)
    # ... then reduce the W (lane) window.
    out = jnp.max(xh.reshape(n, c, hout, wout, POOL), axis=4)         # (N, C, 5, 5)
    out = out.reshape(n, c, hout * wout)                 # lane-flattened store (N, C, 25)
    if use_relu:
        out = jnp.maximum(out, 0.0)
    else:
        out = jnp.where(out > 0, out, alpha_ref[0] * out)
    o_ref[...] = out.astype(o_ref.dtype)


def maxpool2d_act_pallas(x, alpha, use_relu):
    n, c, h, w = x.shape
    hout = (h - POOL) // POOL + 1
    wout = (w - POOL) // POOL + 1
    alpha_arr = jnp.full((1,), alpha, jnp.float32)
    kernel = functools.partial(_maxpool_act_kernel, hout=hout, wout=wout, use_relu=use_relu)
    y = pl.pallas_call(
        kernel,
        out_shape=jax.ShapeDtypeStruct((n, c, hout * wout), x.dtype),
        grid=(1,),
        in_specs=[
            pl.BlockSpec((n, c, h, w), lambda i: (0, 0, 0, 0)),
            pl.BlockSpec(memory_space=pltpu.MemorySpace.SMEM),
        ],
        out_specs=pl.BlockSpec((n, c, hout * wout), lambda i: (0, 0, 0)),
        cost_estimate=pl.CostEstimate(
            flops=n * c * hout * wout * POOL * POOL,
            transcendentals=0,
            bytes_accessed=(x.size + n * c * hout * wout) * 4,
        ),
    )(x, alpha_arr)
    return y.reshape(n, c, hout, wout)                   # free metadata reshape on HBM


# ----------------------------------------------------------------------------
# Module wrapper reproducing ModuleDict forward semantics (NCHW in / NCHW out).
# `choice` / `act` are Python strings (same as the PyTorch forward), so the
# branch selection is static dispatch at trace time.
# ----------------------------------------------------------------------------
class ModuleDictPallas:
    def __init__(self, key):
        kw_key, kb_key = jax.random.split(key)
        fan_in = C_IN * KSIZE * KSIZE
        bound = 1.0 / (fan_in ** 0.5)
        # PyTorch-default-style uniform(-1/sqrt(fan_in), 1/sqrt(fan_in)), OIHW layout.
        self.conv_w = jax.random.uniform(kw_key, (C_OUT, C_IN, KSIZE, KSIZE),
                                         jnp.float32, -bound, bound)
        self.conv_b = jax.random.uniform(kb_key, (C_OUT,), jnp.float32, -bound, bound)
        # Pre-flattened + K-padded (host-side, once) for the in-kernel im2col matmul:
        # column order (kh, kw, cin) matches the in-kernel patch concat order; the
        # 6 padding columns are zero so the kernel's zero-filled patch rows are inert.
        w2d = jnp.transpose(self.conv_w, (0, 2, 3, 1)).reshape(C_OUT, K_RAW)
        self.conv_w2d = jnp.pad(w2d, ((0, 0), (0, K_PAD - K_RAW)))
        self.conv_b2d = self.conv_b.reshape(C_OUT, 1)
        self.prelu_alpha = PRELU_ALPHA                   # runtime scalar (SMEM input)

    def __call__(self, x_nchw, choice, act):
        if act == 'relu':
            use_relu, alpha = True, 0.0
        elif act == 'prelu':
            use_relu, alpha = False, self.prelu_alpha
        else:
            raise KeyError(act)
        if choice == 'conv':
            return conv2d_act_pallas(x_nchw, self.conv_w2d, self.conv_b2d, alpha, use_relu)
        elif choice == 'pool':
            return maxpool2d_act_pallas(x_nchw, alpha, use_relu)
        raise KeyError(choice)


# ----------------------------------------------------------------------------
# Pure-JAX reference (for correctness check only).
# ----------------------------------------------------------------------------
def _ref_forward(model, x_nchw, choice, act):
    if choice == 'conv':
        y = lax.conv_general_dilated(
            x_nchw, model.conv_w, window_strides=(1, 1), padding='VALID',
            dimension_numbers=('NCHW', 'OIHW', 'NCHW'))
        y = y + model.conv_b.reshape(1, -1, 1, 1)
    else:
        y = lax.reduce_window(x_nchw, -jnp.inf, lax.max,
                              (1, 1, POOL, POOL), (1, 1, POOL, POOL), 'VALID')
    if act == 'relu':
        return jnp.maximum(y, 0.0)
    return jnp.where(y > 0, y, model.prelu_alpha * y)


if __name__ == "__main__":
    key = jax.random.PRNGKey(0)
    kx, kparams = jax.random.split(key)
    model = ModuleDictPallas(kparams)

    # Input consistent with Conv2d(10, 10, 3): NCHW, 10 channels.
    x = jax.random.normal(kx, (2, C_IN, 16, 16), jnp.float32)

    # Exercise both ModuleDict branches and both activations.
    y_conv_relu = jax.block_until_ready(model(x, 'conv', 'relu'))     # (2, 10, 14, 14)
    y_conv_prelu = jax.block_until_ready(model(x, 'conv', 'prelu'))   # (2, 10, 14, 14)
    y_pool_relu = jax.block_until_ready(model(x, 'pool', 'relu'))     # (2, 10, 5, 5)
    y_pool_prelu = jax.block_until_ready(model(x, 'pool', 'prelu'))   # (2, 10, 5, 5)

    assert y_conv_relu.shape == (2, C_OUT, 14, 14)
    assert y_pool_prelu.shape == (2, C_IN, 5, 5)
    for y, choice, act in [(y_conv_relu, 'conv', 'relu'),
                           (y_conv_prelu, 'conv', 'prelu'),
                           (y_pool_relu, 'pool', 'relu'),
                           (y_pool_prelu, 'pool', 'prelu')]:
        ref = _ref_forward(model, x, choice, act)
        assert jnp.allclose(y, ref, atol=1e-4, rtol=1e-4), (choice, act)

    print("KERNEL_OK")
</pallas_src>

<mosaic_0001>
module attributes {stable_mosaic.version = 11 : i64} {
  func.func @_conv2d_act_kernel(%arg0: i32, %arg1: memref<2x10x258xf32, #tpu.memory_space<vmem>>, %arg2: memref<10x96xf32, #tpu.memory_space<vmem>>, %arg3: memref<10x1xf32, #tpu.memory_space<vmem>>, %arg4: memref<1xf32, #tpu.memory_space<smem>>, %arg5: memref<2x10x224xf32, #tpu.memory_space<vmem>>) attributes {dimension_semantics = [#tpu.dimension_semantics<arbitrary>], iteration_bounds = array<i64: 1>, scalar_prefetch = 0 : i64, scratch_operands = 0 : i64, tpu.core_type = #tpu.core_type<tc>, window_params = [{pipeline_mode = #tpu.pipeline_mode<synchronous>, transform_indices = @transform_0, window_bounds = array<i64: 2, 10, 258>}, {pipeline_mode = #tpu.pipeline_mode<synchronous>, transform_indices = @transform_1, window_bounds = array<i64: 10, 96>}, {pipeline_mode = #tpu.pipeline_mode<synchronous>, transform_indices = @transform_2, window_bounds = array<i64: 10, 1>}, {transform_indices = @transform_3, window_bounds = array<i64: 1>}, {pipeline_mode = #tpu.pipeline_mode<synchronous>, transform_indices = @transform_4, window_bounds = array<i64: 2, 10, 224>}]} {
    %c0 = arith.constant 0 : index
    %c0_0 = arith.constant 0 : index
    %0 = vector.load %arg2[%c0, %c0_0] : memref<10x96xf32, #tpu.memory_space<vmem>>, vector<10x96xf32>
    %c0_1 = arith.constant 0 : index
    %c0_2 = arith.constant 0 : index
    %1 = vector.load %arg3[%c0_1, %c0_2] : memref<10x1xf32, #tpu.memory_space<vmem>>, vector<10x1xf32>
    %2 = vector.shape_cast %1 : vector<10x1xf32> to vector<10x1xf32>
    %3 = vector.broadcast %2 : vector<10x1xf32> to vector<10x224xf32>
    %cst = arith.constant 0.000000e+00 : f32
    %4 = vector.broadcast %cst : f32 to vector<6x224xf32>
    %c0_3 = arith.constant 0 : index
    %c0_4 = arith.constant 0 : index
    %c0_5 = arith.constant 0 : index
    %5 = vector.load %arg1[%c0_3, %c0_4, %c0_5] : memref<2x10x258xf32, #tpu.memory_space<vmem>>, vector<1x10x258xf32>
    %6 = vector.shape_cast %5 : vector<1x10x258xf32> to vector<10x258xf32>
    %7 = vector.extract_strided_slice %6 {offsets = [0, 0], sizes = [10, 224], strides = [1, 1]} : vector<10x258xf32> to vector<10x224xf32>
    %8 = vector.extract_strided_slice %6 {offsets = [0, 1], sizes = [10, 224], strides = [1, 1]} : vector<10x258xf32> to vector<10x224xf32>
    %9 = vector.extract_strided_slice %6 {offsets = [0, 2], sizes = [10, 224], strides = [1, 1]} : vector<10x258xf32> to vector<10x224xf32>
    %10 = vector.extract_strided_slice %6 {offsets = [0, 16], sizes = [10, 224], strides = [1, 1]} : vector<10x258xf32> to vector<10x224xf32>
    %11 = vector.extract_strided_slice %6 {offsets = [0, 17], sizes = [10, 224], strides = [1, 1]} : vector<10x258xf32> to vector<10x224xf32>
    %12 = vector.extract_strided_slice %6 {offsets = [0, 18], sizes = [10, 224], strides = [1, 1]} : vector<10x258xf32> to vector<10x224xf32>
    %13 = vector.extract_strided_slice %6 {offsets = [0, 32], sizes = [10, 224], strides = [1, 1]} : vector<10x258xf32> to vector<10x224xf32>
    %14 = vector.extract_strided_slice %6 {offsets = [0, 33], sizes = [10, 224], strides = [1, 1]} : vector<10x258xf32> to vector<10x224xf32>
    %15 = vector.extract_strided_slice %6 {offsets = [0, 34], sizes = [10, 224], strides = [1, 1]} : vector<10x258xf32> to vector<10x224xf32>
    %16 = tpu.concatenate %7, %8, %9, %10, %11, %12, %13, %14, %15, %4 in 0 : vector<10x224xf32>, vector<10x224xf32>, vector<10x224xf32>, vector<10x224xf32>, vector<10x224xf32>, vector<10x224xf32>, vector<10x224xf32>, vector<10x224xf32>, vector<10x224xf32>, vector<6x224xf32> -> vector<96x224xf32>
    %cst_6 = arith.constant dense<0.000000e+00> : vector<10x224xf32>
    %17 = tpu.matmul %0, %16, %cst_6 {dimension_numbers = #tpu.dot_dimension_numbers<[1], [0], [0], [1], [0, 0, 1, 1], [], []>} : vector<10x96xf32>, vector<96x224xf32>, vector<10x224xf32> -> vector<10x224xf32>
    %18 = arith.addf %17, %3 : vector<10x224xf32>
    %cst_7 = arith.constant 0.000000e+00 : f32
    %19 = vector.broadcast %cst_7 : f32 to vector<10x224xf32>
    %20 = arith.maximumf %18, %19 : vector<10x224xf32>
    %c0_8 = arith.constant 0 : index
    %c0_9 = arith.constant 0 : index
    %c0_10 = arith.constant 0 : index
    %21 = vector.load %arg5[%c0_8, %c0_9, %c0_10] : memref<2x10x224xf32, #tpu.memory_space<vmem>>, vector<1x10x224xf32>
    %22 = vector.shape_cast %21 : vector<1x10x224xf32> to vector<10x224xf32>
    %23 = vector.shape_cast %20 : vector<10x224xf32> to vector<1x10x224xf32>
    tpu.vector_store %arg5[%c0_8, %c0_9, %c0_10], %23 {strides = array<i32>} : memref<2x10x224xf32, #tpu.memory_space<vmem>>, vector<1x10x224xf32>,
    %c1 = arith.constant 1 : index
    %c0_11 = arith.constant 0 : index
    %c0_12 = arith.constant 0 : index
    %24 = vector.load %arg1[%c1, %c0_11, %c0_12] : memref<2x10x258xf32, #tpu.memory_space<vmem>>, vector<1x10x258xf32>
    %25 = vector.shape_cast %24 : vector<1x10x258xf32> to vector<10x258xf32>
    %26 = vector.extract_strided_slice %25 {offsets = [0, 0], sizes = [10, 224], strides = [1, 1]} : vector<10x258xf32> to vector<10x224xf32>
    %27 = vector.extract_strided_slice %25 {offsets = [0, 1], sizes = [10, 224], strides = [1, 1]} : vector<10x258xf32> to vector<10x224xf32>
    %28 = vector.extract_strided_slice %25 {offsets = [0, 2], sizes = [10, 224], strides = [1, 1]} : vector<10x258xf32> to vector<10x224xf32>
    %29 = vector.extract_strided_slice %25 {offsets = [0, 16], sizes = [10, 224], strides = [1, 1]} : vector<10x258xf32> to vector<10x224xf32>
    %30 = vector.extract_strided_slice %25 {offsets = [0, 17], sizes = [10, 224], strides = [1, 1]} : vector<10x258xf32> to vector<10x224xf32>
    %31 = vector.extract_strided_slice %25 {offsets = [0, 18], sizes = [10, 224], strides = [1, 1]} : vector<10x258xf32> to vector<10x224xf32>
    %32 = vector.extract_strided_slice %25 {offsets = [0, 32], sizes = [10, 224], strides = [1, 1]} : vector<10x258xf32> to vector<10x224xf32>
    %33 = vector.extract_strided_slice %25 {offsets = [0, 33], sizes = [10, 224], strides = [1, 1]} : vector<10x258xf32> to vector<10x224xf32>
    %34 = vector.extract_strided_slice %25 {offsets = [0, 34], sizes = [10, 224], strides = [1, 1]} : vector<10x258xf32> to vector<10x224xf32>
    %35 = tpu.concatenate %26, %27, %28, %29, %30, %31, %32, %33, %34, %4 in 0 : vector<10x224xf32>, vector<10x224xf32>, vector<10x224xf32>, vector<10x224xf32>, vector<10x224xf32>, vector<10x224xf32>, vector<10x224xf32>, vector<10x224xf32>, vector<10x224xf32>, vector<6x224xf32> -> vector<96x224xf32>
    %cst_13 = arith.constant dense<0.000000e+00> : vector<10x224xf32>
    %36 = tpu.matmul %0, %35, %cst_13 {dimension_numbers = #tpu.dot_dimension_numbers<[1], [0], [0], [1], [0, 0, 1, 1], [], []>} : vector<10x96xf32>, vector<96x224xf32>, vector<10x224xf32> -> vector<10x224xf32>
    %37 = arith.addf %36, %3 : vector<10x224xf32>
    %cst_14 = arith.constant 0.000000e+00 : f32
    %38 = vector.broadcast %cst_14 : f32 to vector<10x224xf32>
    %39 = arith.maximumf %37, %38 : vector<10x224xf32>
    %c1_15 = arith.constant 1 : index
    %c0_16 = arith.constant 0 : index
    %c0_17 = arith.constant 0 : index
    %40 = vector.load %arg5[%c1_15, %c0_16, %c0_17] : memref<2x10x224xf32, #tpu.memory_space<vmem>>, vector<1x10x224xf32>
    %41 = vector.shape_cast %40 : vector<1x10x224xf32> to vector<10x224xf32>
    %42 = vector.shape_cast %39 : vector<10x224xf32> to vector<1x10x224xf32>
    tpu.vector_store %arg5[%c1_15, %c0_16, %c0_17], %42 {strides = array<i32>} : memref<2x10x224xf32, #tpu.memory_space<vmem>>, vector<1x10x224xf32>,
    return
  }
  func.func @transform_0(%arg0: i32) -> (i32, i32, i32) {
    %c0_i32 = arith.constant 0 : i32
    %c0_i32_0 = arith.constant 0 : i32
    %c0_i32_1 = arith.constant 0 : i32
    %c0_i32_2 = arith.constant 0 : i32
    return %c0_i32, %c0_i32_0, %c0_i32_1 : i32, i32, i32
  }
  func.func @transform_1(%arg0: i32) -> (i32, i32) {
    %c0_i32 = arith.constant 0 : i32
    %c0_i32_0 = arith.constant 0 : i32
    %c0_i32_1 = arith.constant 0 : i32
    return %c0_i32, %c0_i32_0 : i32, i32
  }
  func.func @transform_2(%arg0: i32) -> (i32, i32) {
    %c0_i32 = arith.constant 0 : i32
    %c0_i32_0 = arith.constant 0 : i32
    %c0_i32_1 = arith.constant 0 : i32
    return %c0_i32, %c0_i32_0 : i32, i32
  }
  func.func @transform_3(%arg0: i32) -> i32 {
    %c0_i32 = arith.constant 0 : i32
    %c0_i32_0 = arith.constant 0 : i32
    return %c0_i32 : i32
  }
  func.func @transform_4(%arg0: i32) -> (i32, i32, i32) {
    %c0_i32 = arith.constant 0 : i32
    %c0_i32_0 = arith.constant 0 : i32
    %c0_i32_1 = arith.constant 0 : i32
    %c0_i32_2 = arith.constant 0 : i32
    return %c0_i32, %c0_i32_0, %c0_i32_1 : i32, i32, i32
  }
}

</mosaic_0001>

<llo_original>
// kernel: tpu_custom_call.1
$region0: #{tpu_custom_call.1}
  #allocation0 [shape = 'u32[]', space=smem, size = 0x4, offset = 0x4, fixed_abs, tag = 'smem constant byte address 0x4 - core index']
  #allocation1 [shape = 'u32[144,128]{1,0:T(1,128)}', space=vmem, size = 0x12000, scoped, tag = 'internal scratch']
  #allocation2 [shape = 'f32[1]{0:T(128)S(6)}', space=smem, size = 0x200, scoped, tag = 'scoped memory for tpu_custom_call.1']
  %s0 = inlined_call_operand.vmem [shape: f32[2,10,258], index: 0, kind: input, shape index: {}]
  %s1 = inlined_call_operand.vmem [shape: f32[10,96], index: 1, kind: input, shape index: {}]
  %s2 = inlined_call_operand.vmem [shape: f32[10,1], index: 2, kind: input, shape index: {}]
  %s3 = inlined_call_operand.<no memory space> [shape: f32[1], index: 3, kind: input, shape index: {}]
  %s4 = inlined_call_operand.vmem [shape: f32[2,10,224], index: 4, kind: output, shape index: {}]
  %s5 = sld [smem:[#allocation0]]
  $region26: #{tpu_custom_call.1} parent=0
    _
  %s7 = ssub.s32 1, %s5
  %s8 = scalar_select 0, %s7, %s5
  %9 = sst [smem:[#allocation2]] %s3
  // Predicated region
  $region2: #{tpu_custom_call.1} parent=0 // pred_check
    _
  $region3: #{tpu_custom_call.1} parent=0 // pred_check_branch
    %11 = sbr.rel (0) target = $region5
  $region4: #{tpu_custom_call.1} parent=0 // pred_region
    _
  $region5: #{tpu_custom_call.1} parent=0 // pred_fallthru
    _
  // Predicated region
  $region6: #{tpu_custom_call.1} parent=0 // pred_check
    _
  $region7: #{tpu_custom_call.1} parent=0 // pred_check_branch
    %13 = sbr.rel (0) target = $region9
  $region8: #{tpu_custom_call.1} parent=0 // pred_region
    _
  $region9: #{tpu_custom_call.1} parent=0 // pred_fallthru
    _
  // Predicated region
  $region10: #{tpu_custom_call.1} parent=0 // pred_check
    _
  $region11: #{tpu_custom_call.1} parent=0 // pred_check_branch
    %15 = sbr.rel (0) target = $region13
  $region12: #{tpu_custom_call.1} parent=0 // pred_region
    _
  $region13: #{tpu_custom_call.1} parent=0 // pred_fallthru
    _
  // Predicated region
  $region14: #{tpu_custom_call.1} parent=0 // pred_check
    _
  $region15: #{tpu_custom_call.1} parent=0 // pred_check_branch
    %17 = sbr.rel (0) target = $region17
  $region16: #{tpu_custom_call.1} parent=0 // pred_region
    _
  $region17: #{tpu_custom_call.1} parent=0 // pred_fallthru
    _
  %v18 = vld [vmem:[%s1] sm:$0xff]
  %v19 = vld [vmem:[%s1 + $0x8] sm:$0x3]
  %v20 = vld [vmem:[%s2] sm:$0xff]
  %v21 = vld [vmem:[%s2 + $0x8] sm:$0x3]
  %23 = vset.pattern.permute.xlu0 0
  %24 = vperm.xlu0 %23, %v20
  %v25 = vpop.permute.xlu0 %24
  %28 = vset.pattern.permute.xlu0 0
  %29 = vperm.xlu0 %28, %v21
  %v30 = vpop.permute.xlu0 %29
  %v32 = vld [vmem:[%s0] sm:$0xff]
  %v33 = vld [vmem:[%s0 + $0x8] sm:$0xff]
  %v34 = vld [vmem:[%s0 + $0x10] sm:$0xff]
  %v35 = vld [vmem:[%s0 + $0x18] sm:$0x3]
  %v36 = vld [vmem:[%s0 + $0x20] sm:$0x3]
  %v37 = vld [vmem:[%s0 + $0x28] sm:$0x3]
  %vm42 = vcmask 1041408
  %v43 = vrot.slane %v32, 6
  %v44 = vrot.slane %v33, 6
  %v45 = vrot.slane %v35, 6
  %v46 = vsel %vm42, %v43, %v45
  %v47 = vrot.slane %v36, 6
  %v48 = vsel %vm42, %v44, %v47
  %49 = vrot.lane.b32.xlu0 %v43, 127
  %v50 = vpop.permute.xlu0 %49
  %51 = vrot.lane.b32.xlu0 %v44, 127
  %v52 = vpop.permute.xlu0 %51
  %53 = vrot.lane.b32.xlu0 %v46, 127
  %v54 = vpop.permute.xlu0 %53
  %55 = vrot.lane.b32.xlu0 %v48, 127
  %v56 = vpop.permute.xlu0 %55
  %vm57 = vcmask 1039360
  %v58 = vsel %vm57, %v50, %v52
  %v59 = vsel %vm57, %v54, %v56
  %vm64 = vcmask 1043456
  %v65 = vrot.slane %v32, 4
  %v66 = vrot.slane %v33, 4
  %v67 = vrot.slane %v35, 4
  %v68 = vsel %vm64, %v65, %v67
  %v69 = vrot.slane %v36, 4
  %v70 = vsel %vm64, %v66, %v69
  %71 = vrot.lane.b32.xlu0 %v65, 126
  %v72 = vpop.permute.xlu0 %71
  %73 = vrot.lane.b32.xlu0 %v66, 126
  %v74 = vpop.permute.xlu0 %73
  %75 = vrot.lane.b32.xlu0 %v68, 126
  %v76 = vpop.permute.xlu0 %75
  %77 = vrot.lane.b32.xlu0 %v70, 126
  %v78 = vpop.permute.xlu0 %77
  %vm79 = vcmask 1031168
  %v80 = vsel %vm79, %v72, %v74
  %v81 = vsel %vm79, %v76, %v78
  %vm86 = vcmask 1045504
  %v87 = vrot.slane %v32, 2
  %v88 = vrot.slane %v33, 2
  %v89 = vrot.slane %v35, 2
  %v90 = vsel %vm86, %v87, %v89
  %v91 = vrot.slane %v36, 2
  %v92 = vsel %vm86, %v88, %v91
  %93 = vrot.lane.b32.xlu0 %v87, 112
  %v94 = vpop.permute.xlu0 %93
  %95 = vrot.lane.b32.xlu0 %v88, 112
  %v96 = vpop.permute.xlu0 %95
  %97 = vrot.lane.b32.xlu0 %v90, 112
  %v98 = vpop.permute.xlu0 %97
  %99 = vrot.lane.b32.xlu0 %v92, 112
  %v100 = vpop.permute.xlu0 %99
  %vm101 = vcmask 916480
  %v102 = vsel %vm101, %v94, %v96
  %v103 = vsel %vm101, %v98, %v100
  %108 = vrot.lane.b32.xlu0 %v32, 111
  %v109 = vpop.permute.xlu0 %108
  %110 = vrot.lane.b32.xlu0 %v33, 111
  %v111 = vpop.permute.xlu0 %110
  %112 = vrot.lane.b32.xlu0 %v35, 111
  %v113 = vpop.permute.xlu0 %112
  %114 = vrot.lane.b32.xlu0 %v36, 111
  %v115 = vpop.permute.xlu0 %114
  %vm116 = vcmask 908288
  %v117 = vsel %vm116, %v109, %v111
  %v118 = vsel %vm116, %v113, %v115
  %123 = vrot.lane.b32.xlu0 %v43, 110
  %v124 = vpop.permute.xlu0 %123
  %125 = vrot.lane.b32.xlu0 %v44, 110
  %v126 = vpop.permute.xlu0 %125
  %127 = vrot.lane.b32.xlu0 %v46, 110
  %v128 = vpop.permute.xlu0 %127
  %129 = vrot.lane.b32.xlu0 %v48, 110
  %v130 = vpop.permute.xlu0 %129
  %vm131 = vcmask 900096
  %v132 = vsel %vm131, %v124, %v126
  %v133 = vsel %vm131, %v128, %v130
  %138 = vrot.lane.b32.xlu0 %v65, 96
  %v139 = vpop.permute.xlu0 %138
  %140 = vrot.lane.b32.xlu0 %v66, 96
  %v141 = vpop.permute.xlu0 %140
  %142 = vrot.lane.b32.xlu0 %v68, 96
  %v143 = vpop.permute.xlu0 %142
  %144 = vrot.lane.b32.xlu0 %v70, 96
  %v145 = vpop.permute.xlu0 %144
  %vm146 = vcmask 785408
  %v147 = vsel %vm146, %v139, %v141
  %v148 = vsel %vm146, %v143, %v145
  %v155 = vrot.slane %v34, 2
  %v156 = vrot.slane %v37, 2
  %v157 = vsel %vm86, %v155, %v156
  %158 = vrot.lane.b32.xlu0 %v87, 95
  %v159 = vpop.permute.xlu0 %158
  %160 = vrot.lane.b32.xlu0 %v88, 95
  %v161 = vpop.permute.xlu0 %160
  %162 = vrot.lane.b32.xlu0 %v155, 95
  %v163 = vpop.permute.xlu0 %162
  %164 = vrot.lane.b32.xlu0 %v90, 95
  %v165 = vpop.permute.xlu0 %164
  %166 = vrot.lane.b32.xlu0 %v92, 95
  %v167 = vpop.permute.xlu0 %166
  %168 = vrot.lane.b32.xlu0 %v157, 95
  %v169 = vpop.permute.xlu0 %168
  %vm170 = vcmask 777216
  %v171 = vsel %vm170, %v159, %v161
  %v172 = vsel %vm170, %v161, %v163
  %v173 = vsel %vm170, %v165, %v167
  %v174 = vsel %vm170, %v167, %v169
  %179 = vrot.lane.b32.xlu0 %v32, 94
  %v180 = vpop.permute.xlu0 %179
  %181 = vrot.lane.b32.xlu0 %v33, 94
  %v182 = vpop.permute.xlu0 %181
  %183 = vrot.lane.b32.xlu0 %v34, 94
  %v184 = vpop.permute.xlu0 %183
  %185 = vrot.lane.b32.xlu0 %v35, 94
  %v186 = vpop.permute.xlu0 %185
  %187 = vrot.lane.b32.xlu0 %v36, 94
  %v188 = vpop.permute.xlu0 %187
  %189 = vrot.lane.b32.xlu0 %v37, 94
  %v190 = vpop.permute.xlu0 %189
  %vm191 = vcmask 769024
  %v192 = vsel %vm191, %v180, %v182
  %v193 = vsel %vm191, %v182, %v184
  %v194 = vsel %vm191, %v186, %v188
  %v195 = vsel %vm191, %v188, %v190
  %v200 = vsel %vm42, %v35, %v58
  %v201 = vsel %vm42, %v36, %v52
  %v202 = vsel %vm64, %v59, %v80
  %v203 = vsel %vm64, %v56, %v74
  %v204 = vsel %vm86, %v81, %v102
  %v205 = vsel %vm86, %v78, %v96
  %v206 = vsel %vm42, %v118, %v132
  %v207 = vsel %vm42, %v115, %v126
  %v208 = vsel %vm64, %v133, %v147
  %v209 = vsel %vm64, %v130, %v141
  %v210 = vsel %vm86, %v148, %v171
  %v211 = vsel %vm86, %v145, %v172
  %v212 = vsel %vm42, %v194, 0.0
  %v213 = vsel %vm42, %v195, 0.0
  %v215 = vsel %vm146, %v18, 0
  %v218 = vsel %vm146, %v19, 0
  %220 = vmatprep.subr.mxu0 %v33
  %221 = vmatpush1.msra.mxu0 %v32
  %222 = vmatprep.subr.mxu0 %v201
  %223 = vmatpush1.msra.mxu0 %v200
  %224 = vmatprep.subr.mxu0 %v203
  %225 = vmatpush1.msra.mxu0 %v202
  %226 = vmatprep.subr.mxu0 %v205
  %227 = vmatpush1.msra.mxu0 %v204
  %228 = vmatprep.subr.mxu0 %v100
  %229 = vmatpush1.msra.mxu0 %v103
  %230 = vmatprep.subr.mxu0 %v111
  %231 = vmatpush1.msra.mxu0 %v117
  %232 = vmatprep.subr.mxu0 %v207
  %233 = vmatpush1.msra.mxu0 %v206
  %234 = vmatprep.subr.mxu0 %v209
  %235 = vmatpush1.msra.mxu0 %v208
  %236 = vmatprep.subr.mxu0 %v211
  %237 = vmatpush1.msra.mxu0 %v210
  %238 = vmatprep.subr.mxu0 %v174
  %239 = vmatpush1.msra.mxu0 %v173
  %240 = vmatprep.subr.mxu0 %v193
  %241 = vmatpush1.msra.mxu0 %v192
  %242 = vmatprep.subr.mxu0 %v213
  %243 = vmatpush1.msra.mxu0 %v212
  %244 = vmatprep.subr.mxu0 0.0
  %245 = vmatpush1.msra.mxu0 0.0
  %246 = vmatprep.subr.mxu0 0.0
  %247 = vmatpush1.msra.mxu0 0.0
  %248 = vmatprep.subr.mxu0 0.0
  %249 = vmatpush1.msra.mxu0 0.0
  %250 = vmatprep.subr.mxu0 0.0
  %251 = vmatpush1.msra.mxu0 0.0
  %252 = vmatprep.subr.mxu0 0.0
  %253 = vmatpush1.msra.mxu0 0.0
  %254 = vmatprep.subr.mxu0 0.0
  %255 = vmatpush1.msra.mxu0 0.0
  %256 = vmatprep.subr.mxu0 0.0
  %257 = vmatpush1.msra.mxu0 0.0
  %258 = vmatprep.subr.mxu0 0.0
  %259 = vmatpush1.msra.mxu0 0.0
  %260 = vmatprep.subr.mxu0 0.0
  %261 = vmatpush1.msra.mxu0 0.0
  %262 = vmatprep.subr.mxu0 0.0
  %263 = vmatpush1.msra.mxu0 0.0
  %264 = vmatprep.subr.mxu0 0.0
  %265 = vmatpush1.msra.mxu0 0.0
  %266 = vmatprep.subr.mxu0 0.0
  %267 = vmatpush1.msra.mxu0 0.0
  %268 = vmatprep.subr.mxu0 0.0
  %269 = vmatpush1.msra.mxu0 0.0
  %270 = vmatprep.subr.mxu0 0.0
  %271 = vmatpush1.msra.mxu0 0.0
  %272 = vmatprep.subr.mxu0 0.0
  %273 = vmatpush1.msra.mxu0 0.0
  %274 = vmatprep.subr.mxu0 0.0
  %275 = vmatpush1.msra.mxu0 0.0
  %276 = vmatprep.subr.mxu0 0.0
  %277 = vmatpush1.msra.mxu0 0.0
  %278 = vmatprep.subr.mxu0 0.0
  %279 = vmatpush1.msra.mxu0 0.0
  %280 = vmatprep.subr.mxu0 0.0
  %281 = vmatpush1.msra.mxu0 0.0
  %282 = vmatprep.subr.mxu0 0.0
  %283 = vmatpush1.msra.mxu0 0.0
  %284 = vmatprep.mubr.f32.mxu0 0.0
  %285 = vmatmul.mubr.f32.gmra.mrb[0].mxu0 %v215
  %v286 = vpop.f32.mrb[0].mxu0
  %v287 = vadd.f32 %v25, %v286
  %v288 = vpop.f32.mrb[0].mxu0
  %v289 = vadd.f32 %v25, %v288
  %290 = vmatprep.mubr.f32.mxu0 0.0
  %291 = vmatmul.mubr.f32.gmra.mrb[0].mxu0 %v218
  %v292 = vpop.f32.mrb[0].mxu0
  %v293 = vadd.f32 %v30, %v292
  %v294 = vpop.f32.mrb[0].mxu0
  %v295 = vadd.f32 %v30, %v294
  %296 = vdwg.mxu0
  %v297 = vmax.f32 %v287, 0.0
  %v298 = vmax.f32 %v289, 0.0
  %v299 = vmax.f32 %v293, 0.0
  %v300 = vmax.f32 %v295, 0.0
  %301 = vst [vmem:[%s4] sm:$0xff] %v297
  %302 = vst.msk [vmem:[%s4 + $0x8] sm:$0xff] %vm146, %v298
  %303 = vst [vmem:[%s4 + $0x10] sm:$0x3] %v299
  %vm304 = vcmask 779264
  %305 = vst.msk [vmem:[%s4 + $0x18] sm:$0x3] %vm304, %v300
  %s306 = scalar_lea.vmem %s0, 48
  %v307 = vld [vmem:[%s306] sm:$0xff]
  %v308 = vld [vmem:[%s306 + $0x8] sm:$0xff]
  %v309 = vld [vmem:[%s306 + $0x10] sm:$0xff]
  %v310 = vld [vmem:[%s306 + $0x18] sm:$0x3]
  %v311 = vld [vmem:[%s306 + $0x20] sm:$0x3]
  %v312 = vld [vmem:[%s306 + $0x28] sm:$0x3]
  %v317 = vrot.slane %v307, 6
  %v318 = vrot.slane %v308, 6
  %v319 = vrot.slane %v310, 6
  %v320 = vsel %vm42, %v317, %v319
  %v321 = vrot.slane %v311, 6
  %v322 = vsel %vm42, %v318, %v321
  %323 = vrot.lane.b32.xlu0 %v317, 127
  %v324 = vpop.permute.xlu0 %323
  %325 = vrot.lane.b32.xlu0 %v318, 127
  %v326 = vpop.permute.xlu0 %325
  %327 = vrot.lane.b32.xlu0 %v320, 127
  %v328 = vpop.permute.xlu0 %327
  %329 = vrot.lane.b32.xlu0 %v322, 127
  %v330 = vpop.permute.xlu0 %329
  %v331 = vsel %vm57, %v324, %v326
  %v332 = vsel %vm57, %v328, %v330
  %v337 = vrot.slane %v307, 4
  %v338 = vrot.slane %v308, 4
  %v339 = vrot.slane %v310, 4
  %v340 = vsel %vm64, %v337, %v339
  %v341 = vrot.slane %v311, 4
  %v342 = vsel %vm64, %v338, %v341
  %343 = vrot.lane.b32.xlu0 %v337, 126
  %v344 = vpop.permute.xlu0 %343
  %345 = vrot.lane.b32.xlu0 %v338, 126
  %v346 = vpop.permute.xlu0 %345
  %347 = vrot.lane.b32.xlu0 %v340, 126
  %v348 = vpop.permute.xlu0 %347
  %349 = vrot.lane.b32.xlu0 %v342, 126
  %v350 = vpop.permute.xlu0 %349
  %v351 = vsel %vm79, %v344, %v346
  %v352 = vsel %vm79, %v348, %v350
  %v357 = vrot.slane %v307, 2
  %v358 = vrot.slane %v308, 2
  %v359 = vrot.slane %v310, 2
  %v360 = vsel %vm86, %v357, %v359
  %v361 = vrot.slane %v311, 2
  %v362 = vsel %vm86, %v358, %v361
  %363 = vrot.lane.b32.xlu0 %v357, 112
  %v364 = vpop.permute.xlu0 %363
  %365 = vrot.lane.b32.xlu0 %v358, 112
  %v366 = vpop.permute.xlu0 %365
  %367 = vrot.lane.b32.xlu0 %v360, 112
  %v368 = vpop.permute.xlu0 %367
  %369 = vrot.lane.b32.xlu0 %v362, 112
  %v370 = vpop.permute.xlu0 %369
  %v371 = vsel %vm101, %v364, %v366
  %v372 = vsel %vm101, %v368, %v370
  %377 = vrot.lane.b32.xlu0 %v307, 111
  %v378 = vpop.permute.xlu0 %377
  %379 = vrot.lane.b32.xlu0 %v308, 111
  %v380 = vpop.permute.xlu0 %379
  %381 = vrot.lane.b32.xlu0 %v310, 111
  %v382 = vpop.permute.xlu0 %381
  %383 = vrot.lane.b32.xlu0 %v311, 111
  %v384 = vpop.permute.xlu0 %383
  %v385 = vsel %vm116, %v378, %v380
  %v386 = vsel %vm116, %v382, %v384
  %391 = vrot.lane.b32.xlu0 %v317, 110
  %v392 = vpop.permute.xlu0 %391
  %393 = vrot.lane.b32.xlu0 %v318, 110
  %v394 = vpop.permute.xlu0 %393
  %395 = vrot.lane.b32.xlu0 %v320, 110
  %v396 = vpop.permute.xlu0 %395
  %397 = vrot.lane.b32.xlu0 %v322, 110
  %v398 = vpop.permute.xlu0 %397
  %v399 = vsel %vm131, %v392, %v394
  %v400 = vsel %vm131, %v396, %v398
  %405 = vrot.lane.b32.xlu0 %v337, 96
  %v406 = vpop.permute.xlu0 %405
  %407 = vrot.lane.b32.xlu0 %v338, 96
  %v408 = vpop.permute.xlu0 %407
  %409 = vrot.lane.b32.xlu0 %v340, 96
  %v410 = vpop.permute.xlu0 %409
  %411 = vrot.lane.b32.xlu0 %v342, 96
  %v412 = vpop.permute.xlu0 %411
  %v413 = vsel %vm146, %v406, %v408
  %v414 = vsel %vm146, %v410, %v412
  %v421 = vrot.slane %v309, 2
  %v422 = vrot.slane %v312, 2
  %v423 = vsel %vm86, %v421, %v422
  %424 = vrot.lane.b32.xlu0 %v357, 95
  %v425 = vpop.permute.xlu0 %424
  %426 = vrot.lane.b32.xlu0 %v358, 95
  %v427 = vpop.permute.xlu0 %426
  %428 = vrot.lane.b32.xlu0 %v421, 95
  %v429 = vpop.permute.xlu0 %428
  %430 = vrot.lane.b32.xlu0 %v360, 95
  %v431 = vpop.permute.xlu0 %430
  %432 = vrot.lane.b32.xlu0 %v362, 95
  %v433 = vpop.permute.xlu0 %432
  %434 = vrot.lane.b32.xlu0 %v423, 95
  %v435 = vpop.permute.xlu0 %434
  %v436 = vsel %vm170, %v425, %v427
  %v437 = vsel %vm170, %v427, %v429
  %v438 = vsel %vm170, %v431, %v433
  %v439 = vsel %vm170, %v433, %v435
  %444 = vrot.lane.b32.xlu0 %v307, 94
  %v445 = vpop.permute.xlu0 %444
  %446 = vrot.lane.b32.xlu0 %v308, 94
  %v447 = vpop.permute.xlu0 %446
  %448 = vrot.lane.b32.xlu0 %v309, 94
  %v449 = vpop.permute.xlu0 %448
  %450 = vrot.lane.b32.xlu0 %v310, 94
  %v451 = vpop.permute.xlu0 %450
  %452 = vrot.lane.b32.xlu0 %v311, 94
  %v453 = vpop.permute.xlu0 %452
  %454 = vrot.lane.b32.xlu0 %v312, 94
  %v455 = vpop.permute.xlu0 %454
  %v456 = vsel %vm191, %v445, %v447
  %v457 = vsel %vm191, %v447, %v449
  %v458 = vsel %vm191, %v451, %v453
  %v459 = vsel %vm191, %v453, %v455
  %v464 = vsel %vm42, %v310, %v331
  %v465 = vsel %vm42, %v311, %v326
  %v466 = vsel %vm64, %v332, %v351
  %v467 = vsel %vm64, %v330, %v346
  %v468 = vsel %vm86, %v352, %v371
  %v469 = vsel %vm86, %v350, %v366
  %v470 = vsel %vm42, %v386, %v399
  %v471 = vsel %vm42, %v384, %v394
  %v472 = vsel %vm64, %v400, %v413
  %v473 = vsel %vm64, %v398, %v408
  %v474 = vsel %vm86, %v414, %v436
  %v475 = vsel %vm86, %v412, %v437
  %v476 = vsel %vm42, %v458, 0.0
  %v477 = vsel %vm42, %v459, 0.0
  %478 = vmatprep.subr.mxu0 %v308
  %479 = vmatpush1.msra.mxu0 %v307
  %480 = vmatprep.subr.mxu0 %v465
  %481 = vmatpush1.msra.mxu0 %v464
  %482 = vmatprep.subr.mxu0 %v467
  %483 = vmatpush1.msra.mxu0 %v466
  %484 = vmatprep.subr.mxu0 %v469
  %485 = vmatpush1.msra.mxu0 %v468
  %486 = vmatprep.subr.mxu0 %v370
  %487 = vmatpush1.msra.mxu0 %v372
  %488 = vmatprep.subr.mxu0 %v380
  %489 = vmatpush1.msra.mxu0 %v385
  %490 = vmatprep.subr.mxu0 %v471
  %491 = vmatpush1.msra.mxu0 %v470
  %492 = vmatprep.subr.mxu0 %v473
  %493 = vmatpush1.msra.mxu0 %v472
  %494 = vmatprep.subr.mxu0 %v475
  %495 = vmatpush1.msra.mxu0 %v474
  %496 = vmatprep.subr.mxu0 %v439
  %497 = vmatpush1.msra.mxu0 %v438
  %498 = vmatprep.subr.mxu0 %v457
  %499 = vmatpush1.msra.mxu0 %v456
  %500 = vmatprep.subr.mxu0 %v477
  %501 = vmatpush1.msra.mxu0 %v476
  %502 = vmatprep.subr.mxu0 0.0
  %503 = vmatpush1.msra.mxu0 0.0
  %504 = vmatprep.subr.mxu0 0.0
  %505 = vmatpush1.msra.mxu0 0.0
  %506 = vmatprep.subr.mxu0 0.0
  %507 = vmatpush1.msra.mxu0 0.0
  %508 = vmatprep.subr.mxu0 0.0
  %509 = vmatpush1.msra.mxu0 0.0
  %510 = vmatprep.subr.mxu0 0.0
  %511 = vmatpush1.msra.mxu0 0.0
  %512 = vmatprep.subr.mxu0 0.0
  %513 = vmatpush1.msra.mxu0 0.0
  %514 = vmatprep.subr.mxu0 0.0
  %515 = vmatpush1.msra.mxu0 0.0
  %516 = vmatprep.subr.mxu0 0.0
  %517 = vmatpush1.msra.mxu0 0.0
  %518 = vmatprep.subr.mxu0 0.0
  %519 = vmatpush1.msra.mxu0 0.0
  %520 = vmatprep.subr.mxu0 0.0
  %521 = vmatpush1.msra.mxu0 0.0
  %522 = vmatprep.subr.mxu0 0.0
  %523 = vmatpush1.msra.mxu0 0.0
  %524 = vmatprep.subr.mxu0 0.0
  %525 = vmatpush1.msra.mxu0 0.0
  %526 = vmatprep.subr.mxu0 0.0
  %527 = vmatpush1.msra.mxu0 0.0
  %528 = vmatprep.subr.mxu0 0.0
  %529 = vmatpush1.msra.mxu0 0.0
  %530 = vmatprep.subr.mxu0 0.0
  %531 = vmatpush1.msra.mxu0 0.0
  %532 = vmatprep.subr.mxu0 0.0
  %533 = vmatpush1.msra.mxu0 0.0
  %534 = vmatprep.subr.mxu0 0.0
  %535 = vmatpush1.msra.mxu0 0.0
  %536 = vmatprep.subr.mxu0 0.0
  %537 = vmatpush1.msra.mxu0 0.0
  %538 = vmatprep.subr.mxu0 0.0
  %539 = vmatpush1.msra.mxu0 0.0
  %540 = vmatprep.subr.mxu0 0.0
  %541 = vmatpush1.msra.mxu0 0.0
  %542 = vmatprep.mubr.f32.mxu0 0.0
  %543 = vmatmul.mubr.f32.gmra.mrb[0].mxu0 %v215
  %v544 = vpop.f32.mrb[0].mxu0
  %v545 = vadd.f32 %v25, %v544
  %v546 = vpop.f32.mrb[0].mxu0
  %v547 = vadd.f32 %v25, %v546
  %548 = vmatprep.mubr.f32.mxu0 0.0
  %549 = vmatmul.mubr.f32.gmra.mrb[0].mxu0 %v218
  %v550 = vpop.f32.mrb[0].mxu0
  %v551 = vadd.f32 %v30, %v550
  %v552 = vpop.f32.mrb[0].mxu0
  %v553 = vadd.f32 %v30, %v552
  %554 = vdwg.mxu0
  %v555 = vmax.f32 %v545, 0.0
  %v556 = vmax.f32 %v547, 0.0
  %v557 = vmax.f32 %v551, 0.0
  %v558 = vmax.f32 %v553, 0.0
  %s559 = scalar_lea.vmem %s4, 32
  %560 = vst [vmem:[%s559] sm:$0xff] %v555
  %561 = vst.msk [vmem:[%s559 + $0x8] sm:$0xff] %vm146, %v556
  %562 = vst [vmem:[%s559 + $0x10] sm:$0x3] %v557
  %563 = vst.msk [vmem:[%s559 + $0x18] sm:$0x3] %vm304, %v558
  // Predicated region
  $region18: #{tpu_custom_call.1} parent=0 // pred_check
    _
  $region19: #{tpu_custom_call.1} parent=0 // pred_check_branch
    %565 = sbr.rel (0) target = $region21
  $region20: #{tpu_custom_call.1} parent=0 // pred_region
    _
  $region21: #{tpu_custom_call.1} parent=0 // pred_fallthru
    _
  // Predicated region
  $region22: #{tpu_custom_call.1} parent=0 // pred_check
    _
  $region23: #{tpu_custom_call.1} parent=0 // pred_check_branch
    %567 = sbr.rel (0) target = $region25
  $region24: #{tpu_custom_call.1} parent=0 // pred_region
    _
  $region25: #{tpu_custom_call.1} parent=0 // pred_fallthru
    _

</llo_original>
